<compile_context>
chip_gen: v5e
topology: v5e:2x2
jax: 0.10.0
libtpu: 0.0.40
codegen_flags: <defaults>
</compile_context>

<pallas_src>
import functools

import jax
import jax.numpy as jnp
from jax.experimental import pallas as pl
from jax.experimental.pallas import tpu as pltpu


def mlp_kernel(x_ref, w1_ref, b1_ref, w2_ref, b2_ref, w3_ref, b3_ref, o_ref):
    """Fused 3-layer MLP on padded slabs: relu(x@W1+b1) -> relu(.@W2+b2) -> .@W3+b3."""
    x = x_ref[...]  # bf16 (TB, IN_P)
    h1 = jnp.dot(x, w1_ref[...], preferred_element_type=jnp.float32) + b1_ref[...]
    h1 = jnp.maximum(h1, 0.0).astype(jnp.bfloat16)
    h2 = jnp.dot(h1, w2_ref[...], preferred_element_type=jnp.float32) + b2_ref[...]
    h2 = jnp.maximum(h2, 0.0).astype(jnp.bfloat16)
    out = jnp.dot(h2, w3_ref[...], preferred_element_type=jnp.float32) + b3_ref[...]
    o_ref[...] = out.astype(o_ref.dtype)


def _pad_to(n, m):
    return ((n + m - 1) // m) * m


def prepare_params(w1, b1, w2, b2, w3, b3):
    """Pad weights/biases to lane-dense (128-multiple) bf16/f32 slabs. Call ONCE."""
    num_in, hidden = w1.shape
    num_out = w3.shape[1]
    # Shape sanity (module: in->hidden, hidden->hidden, hidden->out).
    assert w2.shape == (hidden, hidden), f"w2 must be ({hidden},{hidden}), got {w2.shape}"
    assert w3.shape[0] == hidden, f"w3 must have {hidden} input rows, got {w3.shape}"
    assert b1.shape[-1] == hidden and b2.shape[-1] == hidden and b3.shape[-1] == num_out

    IN_P, HID_P, OUT_P = (_pad_to(d, 128) for d in (num_in, hidden, num_out))

    def pad_w(w, rows, cols):  # bf16 MXU operands, zero padding is exact
        return jnp.zeros((rows, cols), jnp.bfloat16).at[: w.shape[0], : w.shape[1]].set(
            w.astype(jnp.bfloat16)
        )

    def pad_b(b, cols):  # biases stay f32 for the VPU epilogue
        return jnp.zeros((1, cols), jnp.float32).at[:, : b.shape[-1]].set(b.reshape(1, -1))

    params = (
        pad_w(w1, IN_P, HID_P), pad_b(b1, HID_P),
        pad_w(w2, HID_P, HID_P), pad_b(b2, HID_P),
        pad_w(w3, HID_P, OUT_P), pad_b(b3, OUT_P),
    )
    dims = dict(num_in=num_in, hidden=hidden, num_out=num_out,
                IN_P=IN_P, HID_P=HID_P, OUT_P=OUT_P)
    return params, dims


def _pick_tb(batch):
    """Batch tile: 128 on v5e (MXU 128x128), 256 on v6e/v7x (MXU 256x256)."""
    try:
        kind = jax.devices()[0].device_kind.lower()
    except Exception:  # pragma: no cover - non-TPU fallback
        kind = ""
    pad16 = _pad_to(batch, 16)           # bf16 sublane packing
    cap = 128 if "v5" in kind else 256
    tb = min(cap, pad16)
    # v7x: 2 TensorCores/chip — make the "parallel" batch axis have >= 2 grid steps.
    if "v7" in kind and tb > 128 and pad16 // tb < 2:
        tb = 128
    return tb


def _vmem_budget(IN_P, HID_P, OUT_P, tb):
    weights = (IN_P * HID_P + HID_P * HID_P + HID_P * OUT_P) * 2  # bf16 resident
    biases = (2 * HID_P + OUT_P) * 4
    x_tiles = 2 * tb * IN_P * 2      # double-buffered bf16 input tiles
    o_tiles = 2 * tb * OUT_P * 4     # double-buffered f32 output tiles
    # Resident-weight guard: v7x has only 64 MiB VMEM per TensorCore.
    # TODO(synk): K-tile w2/w3 with a pl.when-initialized f32 accumulator once
    #             weights exceed ~40 MiB (hidden >= ~4096) instead of asserting.
    assert weights + biases <= (40 << 20), "hidden dim too large for resident-weight strategy"
    return weights + biases + x_tiles + o_tiles + (4 << 20)  # + slack


@functools.partial(jax.jit, static_argnames=("num_in", "num_out", "tb", "vmem_limit"))
def _mlp_call(x, w1p, b1p, w2p, b2p, w3p, b3p, *, num_in, num_out, tb, vmem_limit):
    B = x.shape[0]
    IN_P, OUT_P = w1p.shape[0], w3p.shape[1]
    B_P = _pad_to(B, tb)

    # Pad/cast x directly into a bf16 slab (single fused pad+cast under jit).
    xp = jnp.zeros((B_P, IN_P), jnp.bfloat16).at[:B, :num_in].set(x.astype(jnp.bfloat16))

    resident = pl.BlockSpec(memory_space=pltpu.MemorySpace.VMEM)  # untiled, single-resident

    out_padded = pl.pallas_call(
        mlp_kernel,
        out_shape=jax.ShapeDtypeStruct((B_P, OUT_P), jnp.float32),
        grid=(B_P // tb,),
        in_specs=[
            pl.BlockSpec((tb, IN_P), lambda i: (i, 0)),  # x: batch-tiled, double-buffered
            resident, resident,                          # w1, b1
            resident, resident,                          # w2, b2
            resident, resident,                          # w3, b3
        ],
        out_specs=pl.BlockSpec((tb, OUT_P), lambda i: (i, 0)),
        compiler_params=pltpu.CompilerParams(
            dimension_semantics=("parallel",),
            vmem_limit_bytes=vmem_limit,
        ),
    )(xp, w1p, b1p, w2p, b2p, w3p, b3p)

    return out_padded[:B, :num_out]


def two_layer_fc(x, params, dims):
    """Forward pass. `params, dims = prepare_params(...)` must be computed once up-front."""
    tb = _pick_tb(x.shape[0])
    vmem_limit = _vmem_budget(dims["IN_P"], dims["HID_P"], dims["OUT_P"], tb)
    return _mlp_call(x, *params, num_in=dims["num_in"], num_out=dims["num_out"],
                     tb=tb, vmem_limit=vmem_limit)


def init_linear(key, fan_in, fan_out):
    # Deterministic init matching nn.Linear's U(-1/sqrt(fan_in), 1/sqrt(fan_in)).
    kw, kb = jax.random.split(key)
    bound = 1.0 / jnp.sqrt(fan_in)
    w = jax.random.uniform(kw, (fan_in, fan_out), jnp.float32, -bound, bound)
    b = jax.random.uniform(kb, (1, fan_out), jnp.float32, -bound, bound)
    return w, b


if __name__ == "__main__":
    num_in, hidden_dim, num_out = 16, 32, 8
    batch = 4  # NOTE: tiny demo shape — kernel is dispatch/DMA-latency bound here.

    key = jax.random.PRNGKey(0)
    kx, k1, k2, k3 = jax.random.split(key, 4)

    x = jax.random.normal(kx, (batch, num_in), jnp.float32)
    w1, b1 = init_linear(k1, num_in, hidden_dim)
    w2, b2 = init_linear(k2, hidden_dim, hidden_dim)
    w3, b3 = init_linear(k3, hidden_dim, num_out)

    # Pad/cast weights ONCE (hoisted out of the per-call path).
    params, dims = prepare_params(w1, b1, w2, b2, w3, b3)
    params = jax.block_until_ready(params)

    out = two_layer_fc(x, params, dims)
    out = jax.block_until_ready(out)
    assert out.shape == (batch, num_out)

    # Reference 1: same bf16-operand / f32-accumulation recipe in pure JAX (tight).
    xb = x.astype(jnp.bfloat16)
    w1b, w2b, w3b = (w.astype(jnp.bfloat16) for w in (w1, w2, w3))
    h = jnp.maximum(jnp.dot(xb, w1b, preferred_element_type=jnp.float32) + b1, 0.0)
    h = h.astype(jnp.bfloat16)
    h = jnp.maximum(jnp.dot(h, w2b, preferred_element_type=jnp.float32) + b2, 0.0)
    h = h.astype(jnp.bfloat16)
    ref_bf16 = jnp.dot(h, w3b, preferred_element_type=jnp.float32) + b3
    assert jnp.allclose(out, ref_bf16, atol=1e-3, rtol=1e-3)

    # Reference 2: full-f32 module semantics (loose, accounts for bf16 operands).
    ref32 = jnp.maximum(x @ w1 + b1, 0.0)
    ref32 = jnp.maximum(ref32 @ w2 + b2, 0.0)
    ref32 = ref32 @ w3 + b3
    assert jnp.allclose(out, ref32, atol=5e-2, rtol=5e-2)

    print("KERNEL_OK")
</pallas_src>

<mosaic_0001>
module attributes {stable_mosaic.version = 11 : i64} {
  func.func @mlp_kernel(%arg0: i32, %arg1: memref<16x128xbf16, #tpu.memory_space<vmem>>, %arg2: memref<128x128xbf16, #tpu.memory_space<vmem>>, %arg3: memref<1x128xf32, #tpu.memory_space<vmem>>, %arg4: memref<128x128xbf16, #tpu.memory_space<vmem>>, %arg5: memref<1x128xf32, #tpu.memory_space<vmem>>, %arg6: memref<128x128xbf16, #tpu.memory_space<vmem>>, %arg7: memref<1x128xf32, #tpu.memory_space<vmem>>, %arg8: memref<16x128xf32, #tpu.memory_space<vmem>>) attributes {dimension_semantics = [#tpu.dimension_semantics<parallel>], iteration_bounds = array<i64: 1>, scalar_prefetch = 0 : i64, scratch_operands = 0 : i64, tpu.core_type = #tpu.core_type<tc>, window_params = [{transform_indices = @transform_0, window_bounds = array<i64: 16, 128>}, {pipeline_mode = #tpu.pipeline_mode<synchronous>, transform_indices = @transform_1, window_bounds = array<i64: 128, 128>}, {pipeline_mode = #tpu.pipeline_mode<synchronous>, transform_indices = @transform_2, window_bounds = array<i64: 1, 128>}, {pipeline_mode = #tpu.pipeline_mode<synchronous>, transform_indices = @transform_3, window_bounds = array<i64: 128, 128>}, {pipeline_mode = #tpu.pipeline_mode<synchronous>, transform_indices = @transform_4, window_bounds = array<i64: 1, 128>}, {pipeline_mode = #tpu.pipeline_mode<synchronous>, transform_indices = @transform_5, window_bounds = array<i64: 128, 128>}, {pipeline_mode = #tpu.pipeline_mode<synchronous>, transform_indices = @transform_6, window_bounds = array<i64: 1, 128>}, {transform_indices = @transform_7, window_bounds = array<i64: 16, 128>}]} {
    %c0 = arith.constant 0 : index
    %c0_0 = arith.constant 0 : index
    %0 = vector.load %arg1[%c0, %c0_0] : memref<16x128xbf16, #tpu.memory_space<vmem>>, vector<16x128xbf16>
    %c0_1 = arith.constant 0 : index
    %c0_2 = arith.constant 0 : index
    %1 = vector.load %arg2[%c0_1, %c0_2] : memref<128x128xbf16, #tpu.memory_space<vmem>>, vector<128x128xbf16>
    %cst = arith.constant dense<0.000000e+00> : vector<16x128xf32>
    %2 = tpu.matmul %0, %1, %cst {dimension_numbers = #tpu.dot_dimension_numbers<[1], [0], [0], [1], [0, 0, 1, 1], [], []>} : vector<16x128xbf16>, vector<128x128xbf16>, vector<16x128xf32> -> vector<16x128xf32>
    %c0_3 = arith.constant 0 : index
    %c0_4 = arith.constant 0 : index
    %3 = vector.load %arg3[%c0_3, %c0_4] : memref<1x128xf32, #tpu.memory_space<vmem>>, vector<1x128xf32>
    %4 = vector.broadcast %3 : vector<1x128xf32> to vector<16x128xf32>
    %5 = arith.addf %2, %4 : vector<16x128xf32>
    %cst_5 = arith.constant 0.000000e+00 : f32
    %6 = vector.broadcast %cst_5 : f32 to vector<16x128xf32>
    %7 = arith.maximumf %5, %6 : vector<16x128xf32>
    %8 = arith.truncf %7 : vector<16x128xf32> to vector<16x128xbf16>
    %c0_6 = arith.constant 0 : index
    %c0_7 = arith.constant 0 : index
    %9 = vector.load %arg4[%c0_6, %c0_7] : memref<128x128xbf16, #tpu.memory_space<vmem>>, vector<128x128xbf16>
    %cst_8 = arith.constant dense<0.000000e+00> : vector<16x128xf32>
    %10 = tpu.matmul %8, %9, %cst_8 {dimension_numbers = #tpu.dot_dimension_numbers<[1], [0], [0], [1], [0, 0, 1, 1], [], []>} : vector<16x128xbf16>, vector<128x128xbf16>, vector<16x128xf32> -> vector<16x128xf32>
    %c0_9 = arith.constant 0 : index
    %c0_10 = arith.constant 0 : index
    %11 = vector.load %arg5[%c0_9, %c0_10] : memref<1x128xf32, #tpu.memory_space<vmem>>, vector<1x128xf32>
    %12 = vector.broadcast %11 : vector<1x128xf32> to vector<16x128xf32>
    %13 = arith.addf %10, %12 : vector<16x128xf32>
    %cst_11 = arith.constant 0.000000e+00 : f32
    %14 = vector.broadcast %cst_11 : f32 to vector<16x128xf32>
    %15 = arith.maximumf %13, %14 : vector<16x128xf32>
    %16 = arith.truncf %15 : vector<16x128xf32> to vector<16x128xbf16>
    %c0_12 = arith.constant 0 : index
    %c0_13 = arith.constant 0 : index
    %17 = vector.load %arg6[%c0_12, %c0_13] : memref<128x128xbf16, #tpu.memory_space<vmem>>, vector<128x128xbf16>
    %cst_14 = arith.constant dense<0.000000e+00> : vector<16x128xf32>
    %18 = tpu.matmul %16, %17, %cst_14 {dimension_numbers = #tpu.dot_dimension_numbers<[1], [0], [0], [1], [0, 0, 1, 1], [], []>} : vector<16x128xbf16>, vector<128x128xbf16>, vector<16x128xf32> -> vector<16x128xf32>
    %c0_15 = arith.constant 0 : index
    %c0_16 = arith.constant 0 : index
    %19 = vector.load %arg7[%c0_15, %c0_16] : memref<1x128xf32, #tpu.memory_space<vmem>>, vector<1x128xf32>
    %20 = vector.broadcast %19 : vector<1x128xf32> to vector<16x128xf32>
    %21 = arith.addf %18, %20 : vector<16x128xf32>
    %c0_17 = arith.constant 0 : index
    %c0_18 = arith.constant 0 : index
    %22 = vector.load %arg8[%c0_17, %c0_18] : memref<16x128xf32, #tpu.memory_space<vmem>>, vector<16x128xf32>
    tpu.vector_store %arg8[%c0_17, %c0_18], %21 {strides = array<i32>} : memref<16x128xf32, #tpu.memory_space<vmem>>, vector<16x128xf32>,
    return
  }
  func.func @transform_0(%arg0: i32) -> (i32, i32) {
    %c0_i32 = arith.constant 0 : i32
    %c0_i32_0 = arith.constant 0 : i32
    return %arg0, %c0_i32 : i32, i32
  }
  func.func @transform_1(%arg0: i32) -> (i32, i32) {
    %c0_i32 = arith.constant 0 : i32
    %c0_i32_0 = arith.constant 0 : i32
    %c0_i32_1 = arith.constant 0 : i32
    return %c0_i32, %c0_i32_0 : i32, i32
  }
  func.func @transform_2(%arg0: i32) -> (i32, i32) {
    %c0_i32 = arith.constant 0 : i32
    %c0_i32_0 = arith.constant 0 : i32
    %c0_i32_1 = arith.constant 0 : i32
    return %c0_i32, %c0_i32_0 : i32, i32
  }
  func.func @transform_3(%arg0: i32) -> (i32, i32) {
    %c0_i32 = arith.constant 0 : i32
    %c0_i32_0 = arith.constant 0 : i32
    %c0_i32_1 = arith.constant 0 : i32
    return %c0_i32, %c0_i32_0 : i32, i32
  }
  func.func @transform_4(%arg0: i32) -> (i32, i32) {
    %c0_i32 = arith.constant 0 : i32
    %c0_i32_0 = arith.constant 0 : i32
    %c0_i32_1 = arith.constant 0 : i32
    return %c0_i32, %c0_i32_0 : i32, i32
  }
  func.func @transform_5(%arg0: i32) -> (i32, i32) {
    %c0_i32 = arith.constant 0 : i32
    %c0_i32_0 = arith.constant 0 : i32
    %c0_i32_1 = arith.constant 0 : i32
    return %c0_i32, %c0_i32_0 : i32, i32
  }
  func.func @transform_6(%arg0: i32) -> (i32, i32) {
    %c0_i32 = arith.constant 0 : i32
    %c0_i32_0 = arith.constant 0 : i32
    %c0_i32_1 = arith.constant 0 : i32
    return %c0_i32, %c0_i32_0 : i32, i32
  }
  func.func @transform_7(%arg0: i32) -> (i32, i32) {
    %c0_i32 = arith.constant 0 : i32
    %c0_i32_0 = arith.constant 0 : i32
    return %arg0, %c0_i32 : i32, i32
  }
}

</mosaic_0001>

<llo_original>
// kernel: _mlp_call.1
$region0: #{_mlp_call.1}
  #allocation0 [shape = 'u32[]', space=smem, size = 0x4, offset = 0x4, fixed_abs, tag = 'smem constant byte address 0x4 - core index']
  #allocation1 [shape = 'u32[72,128]{1,0:T(1,128)}', space=vmem, size = 0x9000, scoped, tag = 'internal scratch']
  %s0 = inlined_call_operand.vmem [shape: bf16[16,128], index: 0, kind: input, shape index: {}]
  %s1 = inlined_call_operand.hbm [shape: bf16[128,128], index: 1, kind: input, shape index: {}]
  %s2 = inlined_call_operand.vmem [shape: f32[1,128], index: 2, kind: input, shape index: {}]
  %s3 = inlined_call_operand.hbm [shape: bf16[128,128], index: 3, kind: input, shape index: {}]
  %s4 = inlined_call_operand.vmem [shape: f32[1,128], index: 4, kind: input, shape index: {}]
  %s5 = inlined_call_operand.hbm [shape: bf16[128,128], index: 5, kind: input, shape index: {}]
  %s6 = inlined_call_operand.vmem [shape: f32[1,128], index: 6, kind: input, shape index: {}]
  %s7 = inlined_call_operand.vmem [shape: f32[16,128], index: 7, kind: output, shape index: {}]
  %s8 = sld [smem:[#allocation0]]
  $region50: #{_mlp_call.1} parent=0
    _
  %s10 = ssub.s32 1, %s8
  %s11 = scalar_select 0, %s10, %s8
  $region1: #{_mlp_call.1} parent=0
    #allocation2 [shape = 'u8[32768]{0}', space=vmem, size = 0x8000, scoped, tag = 'input window, operand 1, single buffered']
    #allocation3 [shape = 's32[1]{0}', space=sflag, size = 0x4, scoped, tag = 'scoped memory for _mlp_call.1']
    #allocation4 [shape = 'u8[32768]{0}', space=vmem, size = 0x8000, scoped, tag = 'input window, operand 3, single buffered']
    #allocation5 [shape = 's32[1]{0}', space=sflag, size = 0x4, scoped, tag = 'scoped memory for _mlp_call.1']
    #allocation6 [shape = 'u8[32768]{0}', space=vmem, size = 0x8000, scoped, tag = 'input window, operand 5, single buffered']
    %12 = vsyncpa [#allocation3], 0
    %13 = vsyncpa [#allocation5], 0
    // Predicated region
    $region2: #{_mlp_call.1} parent=1 // pred_check
      _
    $region3: #{_mlp_call.1} parent=1 // pred_check_branch
      %15 = sbr.rel (0) target = $region5
    $region4: #{_mlp_call.1} parent=1 // pred_region
      _
    $region5: #{_mlp_call.1} parent=1 // pred_fallthru
      _
    // Predicated region
    $region6: #{_mlp_call.1} parent=1 // pred_check
      _
    $region7: #{_mlp_call.1} parent=1 // pred_check_branch
      %17 = sbr.rel (0) target = $region9
    $region8: #{_mlp_call.1} parent=1 // pred_region
      %19 = vsyncadd [#allocation3], 0
      %s20 = sshll.u32 %s1, 4
      %s21 = int_to_ptr.hbm [resolvable:$true] %s20
      %s22 = sshll.u32 [#allocation2], 4
      %s23 = int_to_ptr.vmem [resolvable:$true] %s22
      %28 = dma.hbm_to_vmem [thread:$0]  %s21, 1024, %s23, [#allocation3], 64, 64, 4
    $region9: #{_mlp_call.1} parent=1 // pred_fallthru
      _
    // Predicated region
    $region10: #{_mlp_call.1} parent=1 // pred_check
      _
    $region11: #{_mlp_call.1} parent=1 // pred_check_branch
      %30 = sbr.rel (0) target = $region13
    $region12: #{_mlp_call.1} parent=1 // pred_region
      _
    $region13: #{_mlp_call.1} parent=1 // pred_fallthru
      _
    // Predicated region
    $region14: #{_mlp_call.1} parent=1 // pred_check
      _
    $region15: #{_mlp_call.1} parent=1 // pred_check_branch
      %32 = sbr.rel (0) target = $region17
    $region16: #{_mlp_call.1} parent=1 // pred_region
      %34 = vsyncadd [#allocation5], 0
      %s35 = sshll.u32 %s3, 4
      %s36 = int_to_ptr.hbm [resolvable:$true] %s35
      %s37 = sshll.u32 [#allocation4], 4
      %s38 = int_to_ptr.vmem [resolvable:$true] %s37
      %43 = dma.hbm_to_vmem [thread:$0]  %s36, 1024, %s38, [#allocation5], 64, 64, 4
    $region17: #{_mlp_call.1} parent=1 // pred_fallthru
      _
    // Predicated region
    $region18: #{_mlp_call.1} parent=1 // pred_check
      _
    $region19: #{_mlp_call.1} parent=1 // pred_check_branch
      %45 = sbr.rel (0) target = $region21
    $region20: #{_mlp_call.1} parent=1 // pred_region
      _
    $region21: #{_mlp_call.1} parent=1 // pred_fallthru
      _
    // Predicated region
    $region22: #{_mlp_call.1} parent=1 // pred_check
      _
    $region23: #{_mlp_call.1} parent=1 // pred_check_branch
      %47 = sbr.rel (0) target = $region25
    $region24: #{_mlp_call.1} parent=1 // pred_region
      %49 = vsyncadd [#allocation5], 0
      %s50 = sshll.u32 %s5, 4
      %s51 = int_to_ptr.hbm [resolvable:$true] %s50
      %s52 = sshll.u32 [#allocation6], 4
      %s53 = int_to_ptr.vmem [resolvable:$true] %s52
      %58 = dma.hbm_to_vmem [thread:$0]  %s51, 1024, %s53, [#allocation5], 64, 64, 4
    $region25: #{_mlp_call.1} parent=1 // pred_fallthru
      _
    // Predicated region
    $region26: #{_mlp_call.1} parent=1 // pred_check
      _
    $region27: #{_mlp_call.1} parent=1 // pred_check_branch
      %60 = sbr.rel (0) target = $region29
    $region28: #{_mlp_call.1} parent=1 // pred_region
      _
    $region29: #{_mlp_call.1} parent=1 // pred_fallthru
      _
    // Predicated region
    $region30: #{_mlp_call.1} parent=1 // pred_check
      _
    $region31: #{_mlp_call.1} parent=1 // pred_check_branch
      %62 = sbr.rel (0) target = $region33
    $region32: #{_mlp_call.1} parent=1 // pred_region
      %64 = dma.done [#allocation3], 1024
    $region33: #{_mlp_call.1} parent=1 // pred_fallthru
      _
    // Predicated region
    $region34: #{_mlp_call.1} parent=1 // pred_check
      _
    $region35: #{_mlp_call.1} parent=1 // pred_check_branch
      %66 = sbr.rel (0) target = $region37
    $region36: #{_mlp_call.1} parent=1 // pred_region
      %68 = dma.done [#allocation5], 1024
    $region37: #{_mlp_call.1} parent=1 // pred_fallthru
      _
    // Predicated region
    $region38: #{_mlp_call.1} parent=1 // pred_check
      _
    $region39: #{_mlp_call.1} parent=1 // pred_check_branch
      %70 = sbr.rel (0) target = $region41
    $region40: #{_mlp_call.1} parent=1 // pred_region
      %72 = dma.done [#allocation5], 1024
    $region41: #{_mlp_call.1} parent=1 // pred_fallthru
      _
    %v73 = vld [vmem:[%s0] sm:$0xf]
    %v74 = vld [vmem:[%s0 + $0x4] sm:$0xf]
    %v75 = vld [vmem:[#allocation2] sm:$0xf]
    %v76 = vld [vmem:[#allocation2 + $0x4] sm:$0xf]
    %v77 = vld [vmem:[#allocation2 + $0x8] sm:$0xf]
    %v78 = vld [vmem:[#allocation2 + $0xc] sm:$0xf]
    %v79 = vld [vmem:[#allocation2 + $0x10] sm:$0xf]
    %v80 = vld [vmem:[#allocation2 + $0x14] sm:$0xf]
    %v81 = vld [vmem:[#allocation2 + $0x18] sm:$0xf]
    %v82 = vld [vmem:[#allocation2 + $0x1c] sm:$0xf]
    %v83 = vld [vmem:[#allocation2 + $0x20] sm:$0xf]
    %v84 = vld [vmem:[#allocation2 + $0x24] sm:$0xf]
    %v85 = vld [vmem:[#allocation2 + $0x28] sm:$0xf]
    %v86 = vld [vmem:[#allocation2 + $0x2c] sm:$0xf]
    %v87 = vld [vmem:[#allocation2 + $0x30] sm:$0xf]
    %v88 = vld [vmem:[#allocation2 + $0x34] sm:$0xf]
    %v89 = vld [vmem:[#allocation2 + $0x38] sm:$0xf]
    %v90 = vld [vmem:[#allocation2 + $0x3c] sm:$0xf]
    %v91 = vld [vmem:[%s2] sm:$0x1]
    %v93 = vperm.slane %v91, 0
    %v97 = vunpack.c.l.b16 %v73
    %v98 = vunpack.c.l.b16 %v74
    %v99 = vpack.c.b16 %v98, %v97
    %v117 = vunpack.c.l.b16 %v75
    %v118 = vunpack.c.l.b16 %v76
    %v119 = vunpack.c.l.b16 %v77
    %v120 = vunpack.c.l.b16 %v78
    %v121 = vunpack.c.l.b16 %v79
    %v122 = vunpack.c.l.b16 %v80
    %v123 = vunpack.c.l.b16 %v81
    %v124 = vunpack.c.l.b16 %v82
    %v125 = vunpack.c.l.b16 %v83
    %v126 = vunpack.c.l.b16 %v84
    %v127 = vunpack.c.l.b16 %v85
    %v128 = vunpack.c.l.b16 %v86
    %v129 = vunpack.c.l.b16 %v87
    %v130 = vunpack.c.l.b16 %v88
    %v131 = vunpack.c.l.b16 %v89
    %v132 = vunpack.c.l.b16 %v90
    %v133 = vpack.c.b16 %v118, %v117
    %v134 = vpack.c.b16 %v120, %v119
    %v135 = vpack.c.b16 %v122, %v121
    %v136 = vpack.c.b16 %v124, %v123
    %v137 = vpack.c.b16 %v126, %v125
    %v138 = vpack.c.b16 %v128, %v127
    %v139 = vpack.c.b16 %v130, %v129
    %v140 = vpack.c.b16 %v132, %v131
    %149 = vmatpush.bf16.msra.mxu0 %v140
    %150 = vmatpush.bf16.msra.mxu0 %v139
    %151 = vmatpush.bf16.msra.mxu0 %v138
    %152 = vmatpush.bf16.msra.mxu0 %v137
    %153 = vmatpush.bf16.msra.mxu0 %v136
    %154 = vmatpush.bf16.msra.mxu0 %v135
    %155 = vmatpush.bf16.msra.mxu0 %v134
    %156 = vmatpush.bf16.msra.mxu0 %v133
    %157 = vmatmul.bf16.gmra.mxu0 %v99
    %v158 = vpop.f32.mrf.mxu0
    %v159 = vadd.f32 %v93, %v158
    %v160 = vpop.f32.mrf.mxu0
    %v161 = vadd.f32 %v93, %v160
    %162 = vdwg.mxu0
    %v163 = vmax.f32 %v159, 0.0
    %v164 = vmax.f32 %v161, 0.0
    %v165 = vpack.c.bf16 %v164, %v163
    %v166 = vld [vmem:[#allocation4] sm:$0xf]
    %v167 = vld [vmem:[#allocation4 + $0x4] sm:$0xf]
    %v168 = vld [vmem:[#allocation4 + $0x8] sm:$0xf]
    %v169 = vld [vmem:[#allocation4 + $0xc] sm:$0xf]
    %v170 = vld [vmem:[#allocation4 + $0x10] sm:$0xf]
    %v171 = vld [vmem:[#allocation4 + $0x14] sm:$0xf]
    %v172 = vld [vmem:[#allocation4 + $0x18] sm:$0xf]
    %v173 = vld [vmem:[#allocation4 + $0x1c] sm:$0xf]
    %v174 = vld [vmem:[#allocation4 + $0x20] sm:$0xf]
    %v175 = vld [vmem:[#allocation4 + $0x24] sm:$0xf]
    %v176 = vld [vmem:[#allocation4 + $0x28] sm:$0xf]
    %v177 = vld [vmem:[#allocation4 + $0x2c] sm:$0xf]
    %v178 = vld [vmem:[#allocation4 + $0x30] sm:$0xf]
    %v179 = vld [vmem:[#allocation4 + $0x34] sm:$0xf]
    %v180 = vld [vmem:[#allocation4 + $0x38] sm:$0xf]
    %v181 = vld [vmem:[#allocation4 + $0x3c] sm:$0xf]
    %v182 = vld [vmem:[%s4] sm:$0x1]
    %v184 = vperm.slane %v182, 0
    %v202 = vunpack.c.l.b16 %v166
    %v203 = vunpack.c.l.b16 %v167
    %v204 = vunpack.c.l.b16 %v168
    %v205 = vunpack.c.l.b16 %v169
    %v206 = vunpack.c.l.b16 %v170
    %v207 = vunpack.c.l.b16 %v171
    %v208 = vunpack.c.l.b16 %v172
    %v209 = vunpack.c.l.b16 %v173
    %v210 = vunpack.c.l.b16 %v174
    %v211 = vunpack.c.l.b16 %v175
    %v212 = vunpack.c.l.b16 %v176
    %v213 = vunpack.c.l.b16 %v177
    %v214 = vunpack.c.l.b16 %v178
    %v215 = vunpack.c.l.b16 %v179
    %v216 = vunpack.c.l.b16 %v180
    %v217 = vunpack.c.l.b16 %v181
    %v218 = vpack.c.b16 %v203, %v202
    %v219 = vpack.c.b16 %v205, %v204
    %v220 = vpack.c.b16 %v207, %v206
    %v221 = vpack.c.b16 %v209, %v208
    %v222 = vpack.c.b16 %v211, %v210
    %v223 = vpack.c.b16 %v213, %v212
    %v224 = vpack.c.b16 %v215, %v214
    %v225 = vpack.c.b16 %v217, %v216
    %234 = vmatpush.bf16.msra.mxu0 %v225
    %235 = vmatpush.bf16.msra.mxu0 %v224
    %236 = vmatpush.bf16.msra.mxu0 %v223
    %237 = vmatpush.bf16.msra.mxu0 %v222
    %238 = vmatpush.bf16.msra.mxu0 %v221
    %239 = vmatpush.bf16.msra.mxu0 %v220
    %240 = vmatpush.bf16.msra.mxu0 %v219
    %241 = vmatpush.bf16.msra.mxu0 %v218
    %242 = vmatmul.bf16.gmra.mxu0 %v165
    %v243 = vpop.f32.mrf.mxu0
    %v244 = vadd.f32 %v184, %v243
    %v245 = vpop.f32.mrf.mxu0
    %v246 = vadd.f32 %v184, %v245
    %247 = vdwg.mxu0
    %v248 = vmax.f32 %v244, 0.0
    %v249 = vmax.f32 %v246, 0.0
    %v250 = vpack.c.bf16 %v249, %v248
    %v251 = vld [vmem:[#allocation6] sm:$0xf]
    %v252 = vld [vmem:[#allocation6 + $0x4] sm:$0xf]
    %v253 = vld [vmem:[#allocation6 + $0x8] sm:$0xf]
    %v254 = vld [vmem:[#allocation6 + $0xc] sm:$0xf]
    %v255 = vld [vmem:[#allocation6 + $0x10] sm:$0xf]
    %v256 = vld [vmem:[#allocation6 + $0x14] sm:$0xf]
    %v257 = vld [vmem:[#allocation6 + $0x18] sm:$0xf]
    %v258 = vld [vmem:[#allocation6 + $0x1c] sm:$0xf]
    %v259 = vld [vmem:[#allocation6 + $0x20] sm:$0xf]
    %v260 = vld [vmem:[#allocation6 + $0x24] sm:$0xf]
    %v261 = vld [vmem:[#allocation6 + $0x28] sm:$0xf]
    %v262 = vld [vmem:[#allocation6 + $0x2c] sm:$0xf]
    %v263 = vld [vmem:[#allocation6 + $0x30] sm:$0xf]
    %v264 = vld [vmem:[#allocation6 + $0x34] sm:$0xf]
    %v265 = vld [vmem:[#allocation6 + $0x38] sm:$0xf]
    %v266 = vld [vmem:[#allocation6 + $0x3c] sm:$0xf]
    %v267 = vld [vmem:[%s6] sm:$0x1]
    %v269 = vperm.slane %v267, 0
    %v287 = vunpack.c.l.b16 %v251
    %v288 = vunpack.c.l.b16 %v252
    %v289 = vunpack.c.l.b16 %v253
    %v290 = vunpack.c.l.b16 %v254
    %v291 = vunpack.c.l.b16 %v255
    %v292 = vunpack.c.l.b16 %v256
    %v293 = vunpack.c.l.b16 %v257
    %v294 = vunpack.c.l.b16 %v258
    %v295 = vunpack.c.l.b16 %v259
    %v296 = vunpack.c.l.b16 %v260
    %v297 = vunpack.c.l.b16 %v261
    %v298 = vunpack.c.l.b16 %v262
    %v299 = vunpack.c.l.b16 %v263
    %v300 = vunpack.c.l.b16 %v264
    %v301 = vunpack.c.l.b16 %v265
    %v302 = vunpack.c.l.b16 %v266
    %v303 = vpack.c.b16 %v288, %v287
    %v304 = vpack.c.b16 %v290, %v289
    %v305 = vpack.c.b16 %v292, %v291
    %v306 = vpack.c.b16 %v294, %v293
    %v307 = vpack.c.b16 %v296, %v295
    %v308 = vpack.c.b16 %v298, %v297
    %v309 = vpack.c.b16 %v300, %v299
    %v310 = vpack.c.b16 %v302, %v301
    %319 = vmatpush.bf16.msra.mxu0 %v310
    %320 = vmatpush.bf16.msra.mxu0 %v309
    %321 = vmatpush.bf16.msra.mxu0 %v308
    %322 = vmatpush.bf16.msra.mxu0 %v307
    %323 = vmatpush.bf16.msra.mxu0 %v306
    %324 = vmatpush.bf16.msra.mxu0 %v305
    %325 = vmatpush.bf16.msra.mxu0 %v304
    %326 = vmatpush.bf16.msra.mxu0 %v303
    %327 = vmatmul.bf16.gmra.mxu0 %v250
    %v328 = vpop.f32.mrf.mxu0
    %v329 = vadd.f32 %v269, %v328
    %v330 = vpop.f32.mrf.mxu0
    %v331 = vadd.f32 %v269, %v330
    %332 = vdwg.mxu0
    %333 = vst [vmem:[%s7] sm:$0xff] %v329
    %334 = vst [vmem:[%s7 + $0x8] sm:$0xff] %v331
    // Predicated region
    $region42: #{_mlp_call.1} parent=1 // pred_check
      _
    $region43: #{_mlp_call.1} parent=1 // pred_check_branch
      %336 = sbr.rel (0) target = $region45
    $region44: #{_mlp_call.1} parent=1 // pred_region
      _
    $region45: #{_mlp_call.1} parent=1 // pred_fallthru
      _
    // Predicated region
    $region46: #{_mlp_call.1} parent=1 // pred_check
      _
    $region47: #{_mlp_call.1} parent=1 // pred_check_branch
      %338 = sbr.rel (0) target = $region49
    $region48: #{_mlp_call.1} parent=1 // pred_region
      _
    $region49: #{_mlp_call.1} parent=1 // pred_fallthru
      _
    %339 = vsyncpa [#allocation3], 1
    %340 = vsyncpa [#allocation5], 1

</llo_original>
